<compile_context>
chip_gen: v5e
topology: v5e:2x2
jax: 0.10.0
libtpu: 0.0.40
codegen_flags: <defaults>
</compile_context>

<pallas_src>
import jax
import jax.numpy as jnp
from jax.experimental import pallas as pl
from jax.experimental.pallas import tpu as pltpu


def _chebynet_kernel(x_ref, g_ref, b_ref, o_ref):
    # x_ref: (nb, F_in*C)   batch-row chunk; row n is x[n] flattened as (i, c)
    # g_ref: (F_in*C, P)    fused Chebyshev+weight operator, cols ordered (f, c) (+ zero pad)
    # b_ref: (1, P)         summed bias (f32), bias[f] repeated over the C nodes (+ zero pad)
    # o_ref: (nb, P)        lane-dense output; [:, :F_out*C].reshape(N, F_out, C) is the result
    acc = jnp.dot(x_ref[...], g_ref[...], preferred_element_type=jnp.float32)
    o_ref[...] = jnp.maximum(acc + b_ref[...], 0.0).astype(o_ref.dtype)


def generate_cheby_adj(L, K):
    """[T_0(L)=I, T_1(L)=L, T_k = 2 L T_{k-1} - T_{k-2}] stacked to (K, C, C)."""
    C = L.shape[0]
    support = []
    for i in range(K):
        if i == 0:
            support.append(jnp.eye(C, dtype=L.dtype))
        elif i == 1:
            support.append(L)
        else:
            support.append(2.0 * (L @ support[-1]) - support[-2])
    return jnp.stack(support, axis=0)


def _round_up(n, m):
    return ((n + m - 1) // m) * m


def chebynet_forward(x, L, weights, biases, *, io_dtype=jnp.float32,
                     vmem_limit_bytes=48 * 1024 * 1024):
    """
    x:       (N, F_in, C)  float32
    L:       (C, C)        float32
    weights: (K, F_in, F_out)
    biases:  (K, F_out)
    returns: (N, F_out, C) in io_dtype
    """
    N, F_in, C = x.shape
    K, _, F_out = weights.shape

    # ---- parameter-only preprocessing (x-independent, amortizes over the batch) ----
    adj = generate_cheby_adj(L, K)                                   # (K, C, C)
    # G[(i,d),(f,c)] = sum_k T_k[c,d] * W_k[i,f]  (rows match x's (i,c) flattening,
    # columns match the final (f,c) output flattening).
    g = jnp.einsum("kcd,kif->idfc", adj, weights).reshape(F_in * C, F_out * C)
    bias_row = jnp.repeat(jnp.sum(biases, axis=0), C).reshape(1, F_out * C)

    in_cols = F_in * C
    out_cols = F_out * C
    # Keep the output minor (lane) dim a multiple of 128 -> unmasked vst stores.
    out_cols_p = _round_up(out_cols, 128)
    if out_cols_p != out_cols:
        g = jnp.pad(g, ((0, 0), (0, out_cols_p - out_cols)))
        bias_row = jnp.pad(bias_row, ((0, 0), (0, out_cols_p - out_cols)))

    x_flat = x.reshape(N, in_cols).astype(io_dtype)    # free contiguous view (+ opt. cast)
    g = g.astype(io_dtype)
    bias_row = bias_row.astype(jnp.float32)            # epilogue stays f32

    # ---- batch tile size from the VMEM budget ----
    itemsize = jnp.dtype(io_dtype).itemsize
    # Double-buffered x + out blocks; minor dims are lane-padded to 128 inside VMEM.
    bytes_per_row = 2 * itemsize * (_round_up(in_cols, 128) + out_cols_p)
    # Resident G + bias (charged as 2 buffers in case single-buffering is not honored).
    resident = 2 * itemsize * _round_up(in_cols, 8) * out_cols_p + 2 * 4 * out_cols_p
    budget = int(0.6 * vmem_limit_bytes) - resident
    nb = max(budget // bytes_per_row, 8)
    nb = min(nb, 1024, N)           # ~512-1024-row tiles already reach ~85% of HBM roofline
    if N >= 8:
        nb = max((nb // 8) * 8, 8)  # sublane-aligned block
    else:
        nb = N                      # tiny batch: full-dim block
    grid = (pl.cdiv(N, nb),)        # ragged tail is safe: output rows depend only on x rows

    cost = pl.CostEstimate(
        flops=2 * N * in_cols * out_cols_p,
        transcendentals=0,
        bytes_accessed=itemsize * (N * (in_cols + out_cols_p) + in_cols * out_cols_p)
        + 4 * out_cols_p,
    )

    def _run(single_buffer_constants):
        const_kwargs = (
            dict(pipeline_mode=pl.Buffered(1)) if single_buffer_constants else {}
        )
        return pl.pallas_call(
            _chebynet_kernel,
            out_shape=jax.ShapeDtypeStruct((N, out_cols_p), io_dtype),
            grid_spec=pltpu.PrefetchScalarGridSpec(
                num_scalar_prefetch=0,
                grid=grid,
                in_specs=[
                    pl.BlockSpec((nb, in_cols), lambda i: (i, 0)),               # batch chunk
                    pl.BlockSpec((in_cols, out_cols_p), lambda i: (0, 0),        # fused operator
                                 **const_kwargs),
                    pl.BlockSpec((1, out_cols_p), lambda i: (0, 0),              # bias row
                                 **const_kwargs),
                ],
                out_specs=pl.BlockSpec((nb, out_cols_p), lambda i: (i, 0)),
            ),
            compiler_params=pltpu.CompilerParams(
                dimension_semantics=("parallel",),
                vmem_limit_bytes=vmem_limit_bytes,
            ),
            cost_estimate=cost,
        )(x_flat, g, bias_row)

    try:
        out_flat = _run(True)
    except Exception:
        # Robustness fallback if this JAX build rejects single-buffered constant inputs.
        out_flat = _run(False)

    # Column index is f*C + c, so after dropping the zero pad columns this reshape (free)
    # is already the PyTorch (N, F_out, C) layout.
    return out_flat[:, :out_cols].reshape(N, F_out, C)


def _reference(x, L, weights, biases):
    """Pure-JAX reference mirroring the PyTorch module."""
    K = weights.shape[0]
    adj = generate_cheby_adj(L, K)
    x_perm = jnp.transpose(x, (0, 2, 1))                 # (N, C, F_in)
    result = None
    for k in range(K):
        out = jnp.einsum("cd,ndf->ncf", adj[k], x_perm)  # (N, C, F_in)
        out = out @ weights[k] + biases[k]               # (N, C, F_out)
        out = jnp.transpose(out, (0, 2, 1))              # (N, F_out, C)
        result = out if result is None else result + out
    return jax.nn.relu(result)


if __name__ == "__main__":
    key = jax.random.PRNGKey(0)
    N, F_in, C = 8, 4, 16      # N = B*W merged samples, C = EEG channels (graph nodes)
    K, F_out = 3, 8

    k_x, k_l, k_w, k_b = jax.random.split(key, 4)
    x = jax.random.normal(k_x, (N, F_in, C), dtype=jnp.float32)

    # symmetric normalized-Laplacian-like matrix (synthetic)
    A = jax.random.normal(k_l, (C, C), dtype=jnp.float32)
    L = 0.5 * (A + A.T) / C

    # xavier_normal-scale weights; small nonzero biases to exercise the bias path
    xavier_std = (2.0 / (F_in + F_out)) ** 0.5
    weights = jax.random.normal(k_w, (K, F_in, F_out), dtype=jnp.float32) * xavier_std
    biases = jax.random.normal(k_b, (K, F_out), dtype=jnp.float32) * 0.1

    ref = _reference(x, L, weights, biases)

    # f32 I/O path: matches the PyTorch module numerics.
    out = jax.block_until_ready(chebynet_forward(x, L, weights, biases))
    assert out.shape == (N, F_out, C)
    assert jnp.allclose(out, ref, atol=1e-5, rtol=1e-5)

    # bf16 I/O path (bandwidth-bound production config): f32 MXU accumulate + f32 epilogue.
    out_bf16 = jax.block_until_ready(
        chebynet_forward(x, L, weights, biases, io_dtype=jnp.bfloat16))
    assert out_bf16.shape == (N, F_out, C)
    assert jnp.allclose(out_bf16.astype(jnp.float32), ref, atol=5e-2, rtol=5e-2)

    print("KERNEL_OK")
</pallas_src>

<mosaic_0001>
module attributes {stable_mosaic.version = 11 : i64} {
  func.func @_chebynet_kernel(%arg0: i32, %arg1: memref<8x64xf32, #tpu.memory_space<vmem>>, %arg2: memref<64x128xf32, #tpu.memory_space<vmem>>, %arg3: memref<1x128xf32, #tpu.memory_space<vmem>>, %arg4: memref<8x128xf32, #tpu.memory_space<vmem>>) attributes {dimension_semantics = [#tpu.dimension_semantics<parallel>], iteration_bounds = array<i64: 1>, scalar_prefetch = 0 : i64, scratch_operands = 0 : i64, tpu.core_type = #tpu.core_type<tc>, window_params = [{transform_indices = @transform_0, window_bounds = array<i64: 8, 64>}, {pipeline_mode = #tpu.pipeline_mode<synchronous>, transform_indices = @transform_1, window_bounds = array<i64: 64, 128>}, {pipeline_mode = #tpu.pipeline_mode<synchronous>, transform_indices = @transform_2, window_bounds = array<i64: 1, 128>}, {transform_indices = @transform_3, window_bounds = array<i64: 8, 128>}]} {
    %c0 = arith.constant 0 : index
    %c0_0 = arith.constant 0 : index
    %0 = vector.load %arg1[%c0, %c0_0] : memref<8x64xf32, #tpu.memory_space<vmem>>, vector<8x64xf32>
    %c0_1 = arith.constant 0 : index
    %c0_2 = arith.constant 0 : index
    %1 = vector.load %arg2[%c0_1, %c0_2] : memref<64x128xf32, #tpu.memory_space<vmem>>, vector<64x128xf32>
    %cst = arith.constant dense<0.000000e+00> : vector<8x128xf32>
    %2 = tpu.matmul %0, %1, %cst {dimension_numbers = #tpu.dot_dimension_numbers<[1], [0], [0], [1], [0, 0, 1, 1], [], []>} : vector<8x64xf32>, vector<64x128xf32>, vector<8x128xf32> -> vector<8x128xf32>
    %c0_3 = arith.constant 0 : index
    %c0_4 = arith.constant 0 : index
    %3 = vector.load %arg3[%c0_3, %c0_4] : memref<1x128xf32, #tpu.memory_space<vmem>>, vector<1x128xf32>
    %4 = vector.broadcast %3 : vector<1x128xf32> to vector<8x128xf32>
    %5 = arith.addf %2, %4 : vector<8x128xf32>
    %cst_5 = arith.constant 0.000000e+00 : f32
    %6 = vector.broadcast %cst_5 : f32 to vector<8x128xf32>
    %7 = arith.maximumf %5, %6 : vector<8x128xf32>
    %c0_6 = arith.constant 0 : index
    %c0_7 = arith.constant 0 : index
    %8 = vector.load %arg4[%c0_6, %c0_7] : memref<8x128xf32, #tpu.memory_space<vmem>>, vector<8x128xf32>
    tpu.vector_store %arg4[%c0_6, %c0_7], %7 {strides = array<i32>} : memref<8x128xf32, #tpu.memory_space<vmem>>, vector<8x128xf32>,
    return
  }
  func.func @transform_0(%arg0: i32) -> (i32, i32) {
    %c0_i32 = arith.constant 0 : i32
    %c0_i32_0 = arith.constant 0 : i32
    return %arg0, %c0_i32 : i32, i32
  }
  func.func @transform_1(%arg0: i32) -> (i32, i32) {
    %c0_i32 = arith.constant 0 : i32
    %c0_i32_0 = arith.constant 0 : i32
    %c0_i32_1 = arith.constant 0 : i32
    return %c0_i32, %c0_i32_0 : i32, i32
  }
  func.func @transform_2(%arg0: i32) -> (i32, i32) {
    %c0_i32 = arith.constant 0 : i32
    %c0_i32_0 = arith.constant 0 : i32
    %c0_i32_1 = arith.constant 0 : i32
    return %c0_i32, %c0_i32_0 : i32, i32
  }
  func.func @transform_3(%arg0: i32) -> (i32, i32) {
    %c0_i32 = arith.constant 0 : i32
    %c0_i32_0 = arith.constant 0 : i32
    return %arg0, %c0_i32 : i32, i32
  }
}

module attributes {stable_mosaic.version = 11 : i64} {
  func.func @_chebynet_kernel(%arg0: i32, %arg1: memref<8x64xf32, #tpu.memory_space<vmem>>, %arg2: memref<64x128xf32, #tpu.memory_space<vmem>>, %arg3: memref<1x128xf32, #tpu.memory_space<vmem>>, %arg4: memref<8x128xf32, #tpu.memory_space<vmem>>) attributes {dimension_semantics = [#tpu.dimension_semantics<parallel>], iteration_bounds = array<i64: 1>, scalar_prefetch = 0 : i64, scratch_operands = 0 : i64, tpu.core_type = #tpu.core_type<tc>, window_params = [{transform_indices = @transform_0, window_bounds = array<i64: 8, 64>}, {pipeline_mode = #tpu.pipeline_mode<synchronous>, transform_indices = @transform_1, window_bounds = array<i64: 64, 128>}, {pipeline_mode = #tpu.pipeline_mode<synchronous>, transform_indices = @transform_2, window_bounds = array<i64: 1, 128>}, {transform_indices = @transform_3, window_bounds = array<i64: 8, 128>}]} {
    %c0 = arith.constant 0 : index
    %c0_0 = arith.constant 0 : index
    %0 = vector.load %arg1[%c0, %c0_0] : memref<8x64xf32, #tpu.memory_space<vmem>>, vector<8x64xf32>
    %c0_1 = arith.constant 0 : index
    %c0_2 = arith.constant 0 : index
    %1 = vector.load %arg2[%c0_1, %c0_2] : memref<64x128xf32, #tpu.memory_space<vmem>>, vector<64x128xf32>
    %cst = arith.constant dense<0.000000e+00> : vector<8x128xf32>
    %2 = tpu.matmul %0, %1, %cst {dimension_numbers = #tpu.dot_dimension_numbers<[1], [0], [0], [1], [0, 0, 1, 1], [], []>} : vector<8x64xf32>, vector<64x128xf32>, vector<8x128xf32> -> vector<8x128xf32>
    %c0_3 = arith.constant 0 : index
    %c0_4 = arith.constant 0 : index
    %3 = vector.load %arg3[%c0_3, %c0_4] : memref<1x128xf32, #tpu.memory_space<vmem>>, vector<1x128xf32>
    %4 = vector.broadcast %3 : vector<1x128xf32> to vector<8x128xf32>
    %5 = arith.addf %2, %4 : vector<8x128xf32>
    %cst_5 = arith.constant 0.000000e+00 : f32
    %6 = vector.broadcast %cst_5 : f32 to vector<8x128xf32>
    %7 = arith.maximumf %5, %6 : vector<8x128xf32>
    %c0_6 = arith.constant 0 : index
    %c0_7 = arith.constant 0 : index
    %8 = vector.load %arg4[%c0_6, %c0_7] : memref<8x128xf32, #tpu.memory_space<vmem>>, vector<8x128xf32>
    tpu.vector_store %arg4[%c0_6, %c0_7], %7 {strides = array<i32>} : memref<8x128xf32, #tpu.memory_space<vmem>>, vector<8x128xf32>,
    return
  }
  func.func @transform_0(%arg0: i32) -> (i32, i32) {
    %c0_i32 = arith.constant 0 : i32
    %c0_i32_0 = arith.constant 0 : i32
    return %arg0, %c0_i32 : i32, i32
  }
  func.func @transform_1(%arg0: i32) -> (i32, i32) {
    %c0_i32 = arith.constant 0 : i32
    %c0_i32_0 = arith.constant 0 : i32
    %c0_i32_1 = arith.constant 0 : i32
    return %c0_i32, %c0_i32_0 : i32, i32
  }
  func.func @transform_2(%arg0: i32) -> (i32, i32) {
    %c0_i32 = arith.constant 0 : i32
    %c0_i32_0 = arith.constant 0 : i32
    %c0_i32_1 = arith.constant 0 : i32
    return %c0_i32, %c0_i32_0 : i32, i32
  }
  func.func @transform_3(%arg0: i32) -> (i32, i32) {
    %c0_i32 = arith.constant 0 : i32
    %c0_i32_0 = arith.constant 0 : i32
    return %arg0, %c0_i32 : i32, i32
  }
}

</mosaic_0001>

<llo_original>
// kernel: tpu_custom_call.1
$region0: #{tpu_custom_call.1}
  #allocation0 [shape = 'u32[]', space=smem, size = 0x4, offset = 0x4, fixed_abs, tag = 'smem constant byte address 0x4 - core index']
  #allocation1 [shape = 'u32[72,128]{1,0:T(1,128)}', space=vmem, size = 0x9000, scoped, tag = 'internal scratch']
  %s0 = inlined_call_operand.hbm [shape: f32[8,64], index: 0, kind: input, shape index: {}]
  %s1 = inlined_call_operand.hbm [shape: f32[64,128], index: 1, kind: input, shape index: {}]
  %s2 = inlined_call_operand.vmem [shape: f32[1,128], index: 2, kind: input, shape index: {}]
  %s3 = inlined_call_operand.hbm [shape: f32[8,128], index: 3, kind: output, shape index: {}]
  %s4 = sld [smem:[#allocation0]]
  $region30: #{tpu_custom_call.1} parent=0
    _
  %s6 = ssub.s32 1, %s4
  %s7 = scalar_select 0, %s6, %s4
  $region1: #{tpu_custom_call.1} parent=0
    #allocation2 [shape = 'u8[4096]{0}', space=vmem, size = 0x1000, scoped, tag = 'input window, operand 0, single buffered']
    #allocation3 [shape = 's32[1]{0}', space=sflag, size = 0x4, scoped, tag = 'scoped memory for tpu_custom_call.1']
    #allocation4 [shape = 's32[1]{0}', space=sflag, size = 0x4, scoped, tag = 'scoped memory for tpu_custom_call.1']
    #allocation5 [shape = 'u8[32768]{0}', space=vmem, size = 0x8000, scoped, tag = 'input window, operand 1, single buffered']
    #allocation6 [shape = 's32[1]{0}', space=sflag, size = 0x4, scoped, tag = 'scoped memory for tpu_custom_call.1']
    #allocation7 [shape = 'u8[4096]{0}', space=vmem, size = 0x1000, scoped, tag = 'output window, operand 0, single buffered']
    %8 = vsyncpa [#allocation3], 0
    %9 = vsyncpa [#allocation6], 0
    %10 = vsyncpa [#allocation4], 0
    // Predicated region
    $region2: #{tpu_custom_call.1} parent=1 // pred_check
      _
    $region3: #{tpu_custom_call.1} parent=1 // pred_check_branch
      %12 = sbr.rel (0) target = $region5
    $region4: #{tpu_custom_call.1} parent=1 // pred_region
      %14 = vsyncadd [#allocation3], 0
      %s16 = sshll.u32 %s0, 4
      %s17 = int_to_ptr.hbm [resolvable:$true] %s16
      %s18 = sshll.u32 [#allocation2], 4
      %s19 = int_to_ptr.vmem [resolvable:$true] %s18
      %21 = dma.hbm_to_vmem [thread:$0]  %s17, 128, %s19, [#allocation3]
    $region5: #{tpu_custom_call.1} parent=1 // pred_fallthru
      _
    // Predicated region
    $region6: #{tpu_custom_call.1} parent=1 // pred_check
      _
    $region7: #{tpu_custom_call.1} parent=1 // pred_check_branch
      %23 = sbr.rel (0) target = $region9
    $region8: #{tpu_custom_call.1} parent=1 // pred_region
      %25 = vsyncadd [#allocation6], 0
      %s26 = sshll.u32 %s1, 4
      %s27 = int_to_ptr.hbm [resolvable:$true] %s26
      %s28 = sshll.u32 [#allocation5], 4
      %s29 = int_to_ptr.vmem [resolvable:$true] %s28
      %34 = dma.hbm_to_vmem [thread:$0]  %s27, 1024, %s29, [#allocation6], 128, 128, 8
    $region9: #{tpu_custom_call.1} parent=1 // pred_fallthru
      _
    // Predicated region
    $region10: #{tpu_custom_call.1} parent=1 // pred_check
      _
    $region11: #{tpu_custom_call.1} parent=1 // pred_check_branch
      %36 = sbr.rel (0) target = $region13
    $region12: #{tpu_custom_call.1} parent=1 // pred_region
      _
    $region13: #{tpu_custom_call.1} parent=1 // pred_fallthru
      _
    // Predicated region
    $region14: #{tpu_custom_call.1} parent=1 // pred_check
      _
    $region15: #{tpu_custom_call.1} parent=1 // pred_check_branch
      %38 = sbr.rel (0) target = $region17
    $region16: #{tpu_custom_call.1} parent=1 // pred_region
      %40 = dma.done [#allocation3], 128
    $region17: #{tpu_custom_call.1} parent=1 // pred_fallthru
      _
    // Predicated region
    $region18: #{tpu_custom_call.1} parent=1 // pred_check
      _
    $region19: #{tpu_custom_call.1} parent=1 // pred_check_branch
      %42 = sbr.rel (0) target = $region21
    $region20: #{tpu_custom_call.1} parent=1 // pred_region
      %44 = dma.done [#allocation6], 1024
    $region21: #{tpu_custom_call.1} parent=1 // pred_fallthru
      _
    %v45 = vld [vmem:[#allocation2] sm:$0xff]
    %v46 = vld [vmem:[#allocation5] sm:$0xff]
    %v47 = vld [vmem:[#allocation5 + $0x8] sm:$0xff]
    %v48 = vld [vmem:[#allocation5 + $0x10] sm:$0xff]
    %v49 = vld [vmem:[#allocation5 + $0x18] sm:$0xff]
    %v50 = vld [vmem:[#allocation5 + $0x20] sm:$0xff]
    %v51 = vld [vmem:[#allocation5 + $0x28] sm:$0xff]
    %v52 = vld [vmem:[#allocation5 + $0x30] sm:$0xff]
    %v53 = vld [vmem:[#allocation5 + $0x38] sm:$0xff]
    %v54 = vld [vmem:[%s2] sm:$0x1]
    %v56 = vperm.slane %v54, 0
    %vm58 = vcmask 523264
    %v60 = vsel %vm58, %v45, 0
    %62 = vmatpush.msra.mxu0 0.0
    %63 = vmatpush.msra.mxu0 0.0
    %64 = vmatpush.msra.mxu0 0.0
    %65 = vmatpush.msra.mxu0 0.0
    %66 = vmatpush.msra.mxu0 0.0
    %67 = vmatpush.msra.mxu0 0.0
    %68 = vmatpush.msra.mxu0 0.0
    %69 = vmatpush.msra.mxu0 0.0
    %70 = vmatpush.msra.mxu0 %v53
    %71 = vmatpush.msra.mxu0 %v52
    %72 = vmatpush.msra.mxu0 %v51
    %73 = vmatpush.msra.mxu0 %v50
    %74 = vmatpush.msra.mxu0 %v49
    %75 = vmatpush.msra.mxu0 %v48
    %76 = vmatpush.msra.mxu0 %v47
    %77 = vmatpush.msra.mxu0 %v46
    %78 = vmatmul.f32.gmra.mxu0 %v60
    %v79 = vpop.f32.mrf.mxu0
    %v80 = vadd.f32 %v56, %v79
    %81 = vdwg.mxu0
    %v82 = vmax.f32 %v80, 0.0
    %83 = vst [vmem:[#allocation7] sm:$0xff] %v82
    // Predicated region
    $region22: #{tpu_custom_call.1} parent=1 // pred_check
      _
    $region23: #{tpu_custom_call.1} parent=1 // pred_check_branch
      %85 = sbr.rel (0) target = $region25
    $region24: #{tpu_custom_call.1} parent=1 // pred_region
      %87 = vsyncadd [#allocation4], 0
      %s89 = sshll.u32 [#allocation7], 4
      %s90 = int_to_ptr.vmem [resolvable:$true] %s89
      %s91 = sshll.u32 %s3, 4
      %s92 = int_to_ptr.hbm [resolvable:$true] %s91
      %94 = dma.vmem_to_hbm [thread:$0]  %s90, 128, %s92, [#allocation4]
    $region25: #{tpu_custom_call.1} parent=1 // pred_fallthru
      _
    // Predicated region
    $region26: #{tpu_custom_call.1} parent=1 // pred_check
      _
    $region27: #{tpu_custom_call.1} parent=1 // pred_check_branch
      %96 = sbr.rel (0) target = $region29
    $region28: #{tpu_custom_call.1} parent=1 // pred_region
      %98 = dma.done [#allocation4], 128
    $region29: #{tpu_custom_call.1} parent=1 // pred_fallthru
      _
    %99 = vsyncpa [#allocation3], 1
    %100 = vsyncpa [#allocation6], 1
    %101 = vsyncpa [#allocation4], 1

// kernel: tpu_custom_call.1
$region0: #{tpu_custom_call.1}
  #allocation0 [shape = 'u32[]', space=smem, size = 0x4, offset = 0x4, fixed_abs, tag = 'smem constant byte address 0x4 - core index']
  #allocation1 [shape = 'u32[72,128]{1,0:T(1,128)}', space=vmem, size = 0x9000, scoped, tag = 'internal scratch']
  %s0 = inlined_call_operand.hbm [shape: f32[8,64], index: 0, kind: input, shape index: {}]
  %s1 = inlined_call_operand.hbm [shape: f32[64,128], index: 1, kind: input, shape index: {}]
  %s2 = inlined_call_operand.vmem [shape: f32[1,128], index: 2, kind: input, shape index: {}]
  %s3 = inlined_call_operand.hbm [shape: f32[8,128], index: 3, kind: output, shape index: {}]
  %s4 = sld [smem:[#allocation0]]
  $region30: #{tpu_custom_call.1} parent=0
    _
  %s6 = ssub.s32 1, %s4
  %s7 = scalar_select 0, %s6, %s4
  $region1: #{tpu_custom_call.1} parent=0
    #allocation2 [shape = 'u8[4096]{0}', space=vmem, size = 0x1000, scoped, tag = 'input window, operand 0, single buffered']
    #allocation3 [shape = 's32[1]{0}', space=sflag, size = 0x4, scoped, tag = 'scoped memory for tpu_custom_call.1']
    #allocation4 [shape = 's32[1]{0}', space=sflag, size = 0x4, scoped, tag = 'scoped memory for tpu_custom_call.1']
    #allocation5 [shape = 'u8[32768]{0}', space=vmem, size = 0x8000, scoped, tag = 'input window, operand 1, single buffered']
    #allocation6 [shape = 's32[1]{0}', space=sflag, size = 0x4, scoped, tag = 'scoped memory for tpu_custom_call.1']
    #allocation7 [shape = 'u8[4096]{0}', space=vmem, size = 0x1000, scoped, tag = 'output window, operand 0, single buffered']
    %8 = vsyncpa [#allocation3], 0
    %9 = vsyncpa [#allocation6], 0
    %10 = vsyncpa [#allocation4], 0
    // Predicated region
    $region2: #{tpu_custom_call.1} parent=1 // pred_check
      _
    $region3: #{tpu_custom_call.1} parent=1 // pred_check_branch
      %12 = sbr.rel (0) target = $region5
    $region4: #{tpu_custom_call.1} parent=1 // pred_region
      %14 = vsyncadd [#allocation3], 0
      %s16 = sshll.u32 %s0, 4
      %s17 = int_to_ptr.hbm [resolvable:$true] %s16
      %s18 = sshll.u32 [#allocation2], 4
      %s19 = int_to_ptr.vmem [resolvable:$true] %s18
      %21 = dma.hbm_to_vmem [thread:$0]  %s17, 128, %s19, [#allocation3]
    $region5: #{tpu_custom_call.1} parent=1 // pred_fallthru
      _
    // Predicated region
    $region6: #{tpu_custom_call.1} parent=1 // pred_check
      _
    $region7: #{tpu_custom_call.1} parent=1 // pred_check_branch
      %23 = sbr.rel (0) target = $region9
    $region8: #{tpu_custom_call.1} parent=1 // pred_region
      %25 = vsyncadd [#allocation6], 0
      %s26 = sshll.u32 %s1, 4
      %s27 = int_to_ptr.hbm [resolvable:$true] %s26
      %s28 = sshll.u32 [#allocation5], 4
      %s29 = int_to_ptr.vmem [resolvable:$true] %s28
      %34 = dma.hbm_to_vmem [thread:$0]  %s27, 1024, %s29, [#allocation6], 128, 128, 8
    $region9: #{tpu_custom_call.1} parent=1 // pred_fallthru
      _
    // Predicated region
    $region10: #{tpu_custom_call.1} parent=1 // pred_check
      _
    $region11: #{tpu_custom_call.1} parent=1 // pred_check_branch
      %36 = sbr.rel (0) target = $region13
    $region12: #{tpu_custom_call.1} parent=1 // pred_region
      _
    $region13: #{tpu_custom_call.1} parent=1 // pred_fallthru
      _
    // Predicated region
    $region14: #{tpu_custom_call.1} parent=1 // pred_check
      _
    $region15: #{tpu_custom_call.1} parent=1 // pred_check_branch
      %38 = sbr.rel (0) target = $region17
    $region16: #{tpu_custom_call.1} parent=1 // pred_region
      %40 = dma.done [#allocation3], 128
    $region17: #{tpu_custom_call.1} parent=1 // pred_fallthru
      _
    // Predicated region
    $region18: #{tpu_custom_call.1} parent=1 // pred_check
      _
    $region19: #{tpu_custom_call.1} parent=1 // pred_check_branch
      %42 = sbr.rel (0) target = $region21
    $region20: #{tpu_custom_call.1} parent=1 // pred_region
      %44 = dma.done [#allocation6], 1024
    $region21: #{tpu_custom_call.1} parent=1 // pred_fallthru
      _
    %v45 = vld [vmem:[#allocation2] sm:$0xff]
    %v46 = vld [vmem:[#allocation5] sm:$0xff]
    %v47 = vld [vmem:[#allocation5 + $0x8] sm:$0xff]
    %v48 = vld [vmem:[#allocation5 + $0x10] sm:$0xff]
    %v49 = vld [vmem:[#allocation5 + $0x18] sm:$0xff]
    %v50 = vld [vmem:[#allocation5 + $0x20] sm:$0xff]
    %v51 = vld [vmem:[#allocation5 + $0x28] sm:$0xff]
    %v52 = vld [vmem:[#allocation5 + $0x30] sm:$0xff]
    %v53 = vld [vmem:[#allocation5 + $0x38] sm:$0xff]
    %v54 = vld [vmem:[%s2] sm:$0x1]
    %v56 = vperm.slane %v54, 0
    %vm58 = vcmask 523264
    %v60 = vsel %vm58, %v45, 0
    %62 = vmatpush.msra.mxu0 0.0
    %63 = vmatpush.msra.mxu0 0.0
    %64 = vmatpush.msra.mxu0 0.0
    %65 = vmatpush.msra.mxu0 0.0
    %66 = vmatpush.msra.mxu0 0.0
    %67 = vmatpush.msra.mxu0 0.0
    %68 = vmatpush.msra.mxu0 0.0
    %69 = vmatpush.msra.mxu0 0.0
    %70 = vmatpush.msra.mxu0 %v53
    %71 = vmatpush.msra.mxu0 %v52
    %72 = vmatpush.msra.mxu0 %v51
    %73 = vmatpush.msra.mxu0 %v50
    %74 = vmatpush.msra.mxu0 %v49
    %75 = vmatpush.msra.mxu0 %v48
    %76 = vmatpush.msra.mxu0 %v47
    %77 = vmatpush.msra.mxu0 %v46
    %78 = vmatmul.f32.gmra.mxu0 %v60
    %v79 = vpop.f32.mrf.mxu0
    %v80 = vadd.f32 %v56, %v79
    %81 = vdwg.mxu0
    %v82 = vmax.f32 %v80, 0.0
    %83 = vst [vmem:[#allocation7] sm:$0xff] %v82
    // Predicated region
    $region22: #{tpu_custom_call.1} parent=1 // pred_check
      _
    $region23: #{tpu_custom_call.1} parent=1 // pred_check_branch
      %85 = sbr.rel (0) target = $region25
    $region24: #{tpu_custom_call.1} parent=1 // pred_region
      %87 = vsyncadd [#allocation4], 0
      %s89 = sshll.u32 [#allocation7], 4
      %s90 = int_to_ptr.vmem [resolvable:$true] %s89
      %s91 = sshll.u32 %s3, 4
      %s92 = int_to_ptr.hbm [resolvable:$true] %s91
      %94 = dma.vmem_to_hbm [thread:$0]  %s90, 128, %s92, [#allocation4]
    $region25: #{tpu_custom_call.1} parent=1 // pred_fallthru
      _
    // Predicated region
    $region26: #{tpu_custom_call.1} parent=1 // pred_check
      _
    $region27: #{tpu_custom_call.1} parent=1 // pred_check_branch
      %96 = sbr.rel (0) target = $region29
    $region28: #{tpu_custom_call.1} parent=1 // pred_region
      %98 = dma.done [#allocation4], 128
    $region29: #{tpu_custom_call.1} parent=1 // pred_fallthru
      _
    %99 = vsyncpa [#allocation3], 1
    %100 = vsyncpa [#allocation6], 1
    %101 = vsyncpa [#allocation4], 1

</llo_original>
